<compile_context>
chip_gen: v6e
topology: v6e:2x2x1
jax: 0.10.0
libtpu: 0.0.40
codegen_flags: <defaults>
</compile_context>

<pallas_src>
import functools

import jax
import jax.numpy as jnp
from jax.experimental import pallas as pl
from jax.experimental.pallas import tpu as pltpu

LANE = 128
SUBLANE = 8
MAX_BLOCK_ROWS = 4096   # (4096, 128) f32 = 2 MiB per input per pipeline buffer
NUM_SHARDS = 2          # outer "parallel" axis: both TCs on v7x, no-op on 1-TC chips


def _bce_partial_sum_kernel(o_ref, t_ref, out_ref, *,
                            rows, block_rows, blocks_per_shard):
    """Accumulates per-(sublane, lane) partial BCE sums for one shard into out_ref (8, 128)."""
    s = pl.program_id(0)   # shard axis ("parallel")
    j = pl.program_id(1)   # reduction axis ("arbitrary")

    @pl.when(j == 0)
    def _():
        out_ref[...] = jnp.zeros_like(out_ref)

    o = o_ref[...]
    t = t_ref[...]
    # PyTorch BCELoss clamps each log term at -100 (prevents -inf -> NaN at o in {0,1}).
    log_o = jnp.maximum(jnp.log(o), -100.0)
    log_1mo = jnp.maximum(jnp.log1p(-o), -100.0)
    loss = -(t * log_o + (1.0 - t) * log_1mo)

    block_idx = s * blocks_per_shard + j        # unclamped global block index
    row_start = block_idx * block_rows

    # Fast path: block fully inside the array -> pure VPU accumulate, no masking.
    @pl.when(row_start + block_rows <= rows)
    def _():
        out_ref[...] += loss.reshape(block_rows // SUBLANE, SUBLANE, LANE).sum(axis=0)

    # Slow path (at most one straddling block per shard plus fully-clamped filler
    # blocks): mask rows at/after `rows`, whose data is clamped/unspecified.
    @pl.when(row_start + block_rows > rows)
    def _():
        row_ids = jax.lax.broadcasted_iota(jnp.int32, (block_rows, LANE), 0)
        masked = jnp.where(row_start + row_ids < rows, loss, 0.0)
        out_ref[...] += masked.reshape(block_rows // SUBLANE, SUBLANE, LANE).sum(axis=0)


def bce_loss_2d(outputs, targets):
    """Pallas equivalent of BCELoss2d().forward(outputs, targets) -> scalar mean BCE."""
    assert outputs.shape == targets.shape
    n = int(outputs.size)
    assert 0 < n < 2**31  # int32 row indexing inside the kernel

    flat_o = outputs.reshape(-1).astype(jnp.float32)
    flat_t = targets.reshape(-1).astype(jnp.float32)

    # Pad (only when needed) to an (8*128)-element boundary with o = t = 1.0,
    # which contributes exactly 0 loss -> the padded tail never needs masking.
    pad = (-n) % (SUBLANE * LANE)
    if pad:
        flat_o = jnp.pad(flat_o, (0, pad), constant_values=1.0)
        flat_t = jnp.pad(flat_t, (0, pad), constant_values=1.0)

    rows = (n + pad) // LANE                  # multiple of 8, >= 8
    o2 = flat_o.reshape(rows, LANE)
    t2 = flat_t.reshape(rows, LANE)

    block_rows = min(MAX_BLOCK_ROWS, rows)    # multiple of 8, <= rows
    total_blocks = pl.cdiv(rows, block_rows)
    blocks_per_shard = pl.cdiv(total_blocks, NUM_SHARDS)

    def in_index(s, j):
        b = s * blocks_per_shard + j
        # Clamp fully-out-of-range filler blocks onto a valid block; the kernel
        # masks their contribution to exactly zero.
        return (jnp.minimum(b, total_blocks - 1), 0)

    kernel = functools.partial(
        _bce_partial_sum_kernel,
        rows=rows, block_rows=block_rows, blocks_per_shard=blocks_per_shard)

    partial = pl.pallas_call(
        kernel,
        out_shape=jax.ShapeDtypeStruct((NUM_SHARDS, SUBLANE, LANE), jnp.float32),
        grid_spec=pltpu.PrefetchScalarGridSpec(
            num_scalar_prefetch=0,
            grid=(NUM_SHARDS, blocks_per_shard),
            in_specs=[
                pl.BlockSpec((block_rows, LANE), in_index),
                pl.BlockSpec((block_rows, LANE), in_index),
            ],
            out_specs=pl.BlockSpec((None, SUBLANE, LANE), lambda s, j: (s, 0, 0)),
        ),
        compiler_params=pltpu.CompilerParams(
            dimension_semantics=("parallel", "arbitrary"),
        ),
        cost_estimate=pl.CostEstimate(
            flops=6 * n,
            transcendentals=2 * n,
            bytes_accessed=8 * n + NUM_SHARDS * SUBLANE * LANE * 4),
    )(o2, t2)

    # Tiny final combine (2 x 8 x 128) + mean normalization in XLA.
    return jnp.sum(partial) / jnp.float32(n)


def _reference_bce(outputs, targets):
    o = outputs.astype(jnp.float32)
    t = targets.astype(jnp.float32)
    log_o = jnp.maximum(jnp.log(o), -100.0)
    log_1mo = jnp.maximum(jnp.log1p(-o), -100.0)
    return jnp.mean(-(t * log_o + (1.0 - t) * log_1mo))


if __name__ == "__main__":
    key = jax.random.PRNGKey(0)
    k1, k2, k3, k4 = jax.random.split(key, 4)

    # NCHW probabilities / binary targets, matching the train_step2.py usage.
    B, C, H, W = 2, 4, 16, 16
    outputs = jax.nn.sigmoid(jax.random.normal(k1, (B, C, H, W), dtype=jnp.float32))
    targets = (jax.random.uniform(k2, (B, C, H, W)) > 0.5).astype(jnp.float32)

    loss = bce_loss_2d(outputs, targets)
    jax.block_until_ready(loss)
    ref = _reference_bce(outputs, targets)
    assert jnp.allclose(loss, ref, atol=1e-5, rtol=1e-5), (loss, ref)

    # Ragged size: exercises the pad-with-ones tail + masked filler block.
    o_r = jax.nn.sigmoid(jax.random.normal(k3, (2, 3, 7, 5), dtype=jnp.float32))
    t_r = (jax.random.uniform(k4, (2, 3, 7, 5)) > 0.5).astype(jnp.float32)
    loss_r = bce_loss_2d(o_r, t_r)
    jax.block_until_ready(loss_r)
    ref_r = _reference_bce(o_r, t_r)
    assert jnp.allclose(loss_r, ref_r, atol=1e-5, rtol=1e-5), (loss_r, ref_r)

    print("KERNEL_OK")
</pallas_src>

<mosaic_0001>
module attributes {stable_mosaic.version = 11 : i64} {
  func.func @_bce_partial_sum_kernel(%arg0: i32, %arg1: i32, %arg2: memref<16x128xf32, #tpu.memory_space<vmem>>, %arg3: memref<16x128xf32, #tpu.memory_space<vmem>>, %arg4: memref<1x8x128xf32, #tpu.memory_space<vmem>>) attributes {dimension_semantics = [#tpu.dimension_semantics<parallel>, #tpu.dimension_semantics<arbitrary>], iteration_bounds = array<i64: 2, 1>, scalar_prefetch = 0 : i64, scratch_operands = 0 : i64, tpu.core_type = #tpu.core_type<tc>, window_params = [{transform_indices = @transform_0, window_bounds = array<i64: 16, 128>}, {transform_indices = @transform_1, window_bounds = array<i64: 16, 128>}, {transform_indices = @transform_2, window_bounds = array<i64: 1, 8, 128>}]} {
    %c0_i32 = arith.constant 0 : i32
    %0 = arith.cmpi eq, %arg1, %c0_i32 : i32
    %1 = arith.extui %0 : i1 to i32
    %c0_i32_0 = arith.constant 0 : i32
    %2 = arith.cmpi ne, %1, %c0_i32_0 : i32
    scf.if %2 {
      %cst_14 = arith.constant 0.000000e+00 : f32
      %31 = vector.broadcast %cst_14 : f32 to vector<8x128xf32>
      %c0_15 = arith.constant 0 : index
      %c0_16 = arith.constant 0 : index
      %c0_17 = arith.constant 0 : index
      %32 = vector.load %arg4[%c0_15, %c0_16, %c0_17] : memref<1x8x128xf32, #tpu.memory_space<vmem>>, vector<1x8x128xf32>
      %33 = vector.shape_cast %32 : vector<1x8x128xf32> to vector<8x128xf32>
      %34 = vector.shape_cast %31 : vector<8x128xf32> to vector<1x8x128xf32>
      tpu.vector_store %arg4[%c0_15, %c0_16, %c0_17], %34 {strides = array<i32>} : memref<1x8x128xf32, #tpu.memory_space<vmem>>, vector<1x8x128xf32>,
    } else {
    }
    %c0 = arith.constant 0 : index
    %c0_1 = arith.constant 0 : index
    %3 = vector.load %arg2[%c0, %c0_1] : memref<16x128xf32, #tpu.memory_space<vmem>>, vector<16x128xf32>
    %c0_2 = arith.constant 0 : index
    %c0_3 = arith.constant 0 : index
    %4 = vector.load %arg3[%c0_2, %c0_3] : memref<16x128xf32, #tpu.memory_space<vmem>>, vector<16x128xf32>
    %5 = math.log %3 : vector<16x128xf32>
    %cst = arith.constant -1.000000e+02 : f32
    %6 = vector.broadcast %cst : f32 to vector<16x128xf32>
    %7 = arith.maximumf %5, %6 : vector<16x128xf32>
    %cst_4 = arith.constant 0.000000e+00 : f32
    %8 = vector.broadcast %cst_4 : f32 to vector<16x128xf32>
    %9 = arith.subf %8, %3 : vector<16x128xf32>
    %10 = math.log1p %9 : vector<16x128xf32>
    %cst_5 = arith.constant -1.000000e+02 : f32
    %11 = vector.broadcast %cst_5 : f32 to vector<16x128xf32>
    %12 = arith.maximumf %10, %11 : vector<16x128xf32>
    %13 = arith.mulf %4, %7 : vector<16x128xf32>
    %cst_6 = arith.constant 1.000000e+00 : f32
    %14 = vector.broadcast %cst_6 : f32 to vector<16x128xf32>
    %15 = arith.subf %14, %4 : vector<16x128xf32>
    %16 = arith.mulf %15, %12 : vector<16x128xf32>
    %17 = arith.addf %13, %16 : vector<16x128xf32>
    %cst_7 = arith.constant 0.000000e+00 : f32
    %18 = vector.broadcast %cst_7 : f32 to vector<16x128xf32>
    %19 = arith.subf %18, %17 : vector<16x128xf32>
    %c1_i32 = arith.constant 1 : i32
    %20 = arith.muli %arg0, %c1_i32 : i32
    %21 = arith.addi %20, %arg1 : i32
    %c16_i32 = arith.constant 16 : i32
    %22 = arith.muli %21, %c16_i32 : i32
    %c16_i32_8 = arith.constant 16 : i32
    %23 = arith.addi %22, %c16_i32_8 : i32
    %c16_i32_9 = arith.constant 16 : i32
    %24 = arith.cmpi sle, %23, %c16_i32_9 : i32
    %25 = arith.extui %24 : i1 to i32
    %c0_i32_10 = arith.constant 0 : i32
    %26 = arith.cmpi ne, %25, %c0_i32_10 : i32
    scf.if %26 {
      %c0_14 = arith.constant 0 : index
      %c0_15 = arith.constant 0 : index
      %c0_16 = arith.constant 0 : index
      %31 = vector.load %arg4[%c0_14, %c0_15, %c0_16] : memref<1x8x128xf32, #tpu.memory_space<vmem>>, vector<1x8x128xf32>
      %32 = vector.shape_cast %31 : vector<1x8x128xf32> to vector<8x128xf32>
      %33 = vector.shape_cast %19 : vector<16x128xf32> to vector<2x8x128xf32>
      %cst_17 = arith.constant dense<0.000000e+00> : vector<8x128xf32>
      %34 = vector.multi_reduction <add>, %33, %cst_17 [0] : vector<2x8x128xf32> to vector<8x128xf32>
      %35 = arith.addf %32, %34 : vector<8x128xf32>
      %c0_18 = arith.constant 0 : index
      %c0_19 = arith.constant 0 : index
      %c0_20 = arith.constant 0 : index
      %36 = vector.load %arg4[%c0_18, %c0_19, %c0_20] : memref<1x8x128xf32, #tpu.memory_space<vmem>>, vector<1x8x128xf32>
      %37 = vector.shape_cast %36 : vector<1x8x128xf32> to vector<8x128xf32>
      %38 = vector.shape_cast %35 : vector<8x128xf32> to vector<1x8x128xf32>
      tpu.vector_store %arg4[%c0_18, %c0_19, %c0_20], %38 {strides = array<i32>} : memref<1x8x128xf32, #tpu.memory_space<vmem>>, vector<1x8x128xf32>,
    } else {
    }
    %c16_i32_11 = arith.constant 16 : i32
    %27 = arith.addi %22, %c16_i32_11 : i32
    %c16_i32_12 = arith.constant 16 : i32
    %28 = arith.cmpi sgt, %27, %c16_i32_12 : i32
    %29 = arith.extui %28 : i1 to i32
    %c0_i32_13 = arith.constant 0 : i32
    %30 = arith.cmpi ne, %29, %c0_i32_13 : i32
    scf.if %30 {
      %31 = tpu.iota {dimensions = array<i32: 0>} : vector<16x128xi32>
      %32 = vector.broadcast %22 : i32 to vector<16x128xi32>
      %33 = arith.addi %32, %31 : vector<16x128xi32>
      %c16_i32_14 = arith.constant 16 : i32
      %34 = vector.broadcast %c16_i32_14 : i32 to vector<16x128xi32>
      %35 = arith.cmpi slt, %33, %34 : vector<16x128xi32>
      %cst_15 = arith.constant 0.000000e+00 : f32
      %36 = vector.broadcast %cst_15 : f32 to vector<16x128xf32>
      %37 = arith.select %35, %19, %36 : vector<16x128xi1>, vector<16x128xf32>
      %c0_16 = arith.constant 0 : index
      %c0_17 = arith.constant 0 : index
      %c0_18 = arith.constant 0 : index
      %38 = vector.load %arg4[%c0_16, %c0_17, %c0_18] : memref<1x8x128xf32, #tpu.memory_space<vmem>>, vector<1x8x128xf32>
      %39 = vector.shape_cast %38 : vector<1x8x128xf32> to vector<8x128xf32>
      %40 = vector.shape_cast %37 : vector<16x128xf32> to vector<2x8x128xf32>
      %cst_19 = arith.constant dense<0.000000e+00> : vector<8x128xf32>
      %41 = vector.multi_reduction <add>, %40, %cst_19 [0] : vector<2x8x128xf32> to vector<8x128xf32>
      %42 = arith.addf %39, %41 : vector<8x128xf32>
      %c0_20 = arith.constant 0 : index
      %c0_21 = arith.constant 0 : index
      %c0_22 = arith.constant 0 : index
      %43 = vector.load %arg4[%c0_20, %c0_21, %c0_22] : memref<1x8x128xf32, #tpu.memory_space<vmem>>, vector<1x8x128xf32>
      %44 = vector.shape_cast %43 : vector<1x8x128xf32> to vector<8x128xf32>
      %45 = vector.shape_cast %42 : vector<8x128xf32> to vector<1x8x128xf32>
      tpu.vector_store %arg4[%c0_20, %c0_21, %c0_22], %45 {strides = array<i32>} : memref<1x8x128xf32, #tpu.memory_space<vmem>>, vector<1x8x128xf32>,
    } else {
    }
    return
  }
  func.func @transform_0(%arg0: i32, %arg1: i32) -> (i32, i32) {
    %c1_i32 = arith.constant 1 : i32
    %0 = arith.muli %arg0, %c1_i32 : i32
    %1 = arith.addi %0, %arg1 : i32
    %c0_i32 = arith.constant 0 : i32
    %2 = arith.minsi %1, %c0_i32 : i32
    %c0_i32_0 = arith.constant 0 : i32
    %c0_i32_1 = arith.constant 0 : i32
    return %2, %c0_i32_0 : i32, i32
  }
  func.func @transform_1(%arg0: i32, %arg1: i32) -> (i32, i32) {
    %c1_i32 = arith.constant 1 : i32
    %0 = arith.muli %arg0, %c1_i32 : i32
    %1 = arith.addi %0, %arg1 : i32
    %c0_i32 = arith.constant 0 : i32
    %2 = arith.minsi %1, %c0_i32 : i32
    %c0_i32_0 = arith.constant 0 : i32
    %c0_i32_1 = arith.constant 0 : i32
    return %2, %c0_i32_0 : i32, i32
  }
  func.func @transform_2(%arg0: i32, %arg1: i32) -> (i32, i32, i32) {
    %c0_i32 = arith.constant 0 : i32
    %c0_i32_0 = arith.constant 0 : i32
    %c0_i32_1 = arith.constant 0 : i32
    return %arg0, %c0_i32, %c0_i32_0 : i32, i32, i32
  }
}

</mosaic_0001>

<llo_original>
// kernel: tpu_custom_call.1
$region0: #{tpu_custom_call.1}
  #allocation0 [shape = 'u32[]', space=smem, size = 0x4, offset = 0x4, fixed_abs, tag = 'smem constant byte address 0x4 - core index']
  #allocation1 [shape = 'u32[144,128]{1,0:T(1,128)}', space=vmem, size = 0x12000, scoped, tag = 'internal scratch']
  %s0 = inlined_call_operand.hbm [shape: f32[16,128], index: 0, kind: input, shape index: {}]
  %s1 = inlined_call_operand.hbm [shape: f32[16,128], index: 1, kind: input, shape index: {}]
  %s2 = inlined_call_operand.hbm [shape: f32[2,8,128], index: 2, kind: output, shape index: {}]
  %s3 = sld [smem:[#allocation0]]
  $region61: #{tpu_custom_call.1} parent=0
    _
  %s5 = ssub.s32 1, %s3
  %s6 = scalar_select 0, %s5, %s3
  $region1: #{tpu_custom_call.1} parent=0
    #allocation2 [shape = 'u8[16384]{0}', space=vmem, size = 0x4000, scoped, tag = 'input window, operand 0']
    #allocation3 [shape = 's32[2]{0}', space=sflag, size = 0x8, scoped, tag = 'scoped memory for tpu_custom_call.1']
    #allocation4 [shape = 's32[2]{0}', space=sflag, size = 0x8, scoped, tag = 'scoped memory for tpu_custom_call.1']
    #allocation5 [shape = 'u8[16384]{0}', space=vmem, size = 0x4000, scoped, tag = 'input window, operand 1']
    #allocation6 [shape = 's32[2]{0}', space=sflag, size = 0x8, scoped, tag = 'scoped memory for tpu_custom_call.1']
    #allocation7 [shape = 'u8[8192]{0}', space=vmem, size = 0x2000, scoped, tag = 'output window, operand 0']
    %7 = vsyncpa [#allocation3], 0
    %s8 = scalar_lea.sflag [#allocation3], 1
    %9 = vsyncpa %s8, 0
    %10 = vsyncpa [#allocation6], 0
    %s11 = scalar_lea.sflag [#allocation6], 1
    %12 = vsyncpa %s11, 0
    %13 = vsyncpa [#allocation4], 0
    %s14 = scalar_lea.sflag [#allocation4], 1
    %15 = vsyncpa %s14, 0
    loop: start=0, step=1, limit=4
    $region2: #{tpu_custom_call.1} parent=1 // loop_pre_header
      _
    $region3: #{tpu_custom_call.1} parent=1 // loop_header
      %s17 = sphi 0, %s21
      %p18 = scmp.ge.s32.totalorder %s17, 4
      %s24 = sphi 0, %s36
      %s25 = sphi 0, %s32
      %s26 = sphi 0, %s24
      %s27 = sphi 0, %s25
      %s28 = sphi 0, %s26
      %s29 = sphi 0, %s27
      %s45 = sphi 0, %s47
      %s48 = sphi 0, %s45
      %s49 = sphi 0, %s48
      %s65 = sphi 0, %s49
      %s77 = sphi 0, %s79
      %s80 = sphi 0, %s77
      %s81 = sphi 0, %s80
      %s97 = sphi 0, %s81
      %s103 = sphi 0, %s105
      %s106 = sphi 0, %s103
      %s107 = sphi 0, %s106
      %s123 = sphi 0, %s107
    $region4: #{tpu_custom_call.1} parent=1 // loop_header_branch
      %20 = sbr.rel (%p18) target = $region8
    $region5: #{tpu_custom_call.1} parent=1 // loop_body
      %s22 = ssub.s32 %s17, 1
      %s23 = ssub.s32 %s17, 2
      %s30 = sadd.s32 1, %s25
      %p31 = scmp.ge.s32.totalorder %s30, 1
      %s32 = scalar_select %p31, 0, %s30
      %s33 = sadd.s32 1, %s24
      %s34 = scalar_select %p31, %s33, %s24
      %p35 = scmp.ge.s32.totalorder %s34, 2
      %s36 = scalar_select %p35, 0, %s34
      %s37 = sadd.s32 %s24, %s25
      %p38 = scmp.lt.s32.totalorder %s37, 0
      %s39 = scalar_select %p38, %s37, 0
      %s40 = sadd.s32 %s36, %s32
      %p41 = scmp.lt.s32.totalorder %s40, 0
      %s42 = scalar_select %p41, %s40, 0
      %s43 = ssub.s32 %s39, %s42
      %p44 = scmp.eq.s32.totalorder %s43, 0
      %s46 = sadd.s32 %s45, 1
      %s47 = scalar_select %p44, %s45, %s46
      %p50 = pneg %p44
      %p51 = scmp.eq.s32.totalorder %s17, 1
      %p52 = por %p50, %p51
      %p53 = scmp.ne.s32.totalorder %s45, %s48
      %p54 = scmp.eq.s32.totalorder %s17, 0
      %p55 = por %p53, %p54
      %p56 = scmp.ne.s32.totalorder %s45, %s48
      %p57 = scmp.eq.s32.totalorder %s22, 1
      %p58 = por %p56, %p57
      %p59 = scmp.ne.s32.totalorder %s48, %s49
      %p60 = scmp.eq.s32.totalorder %s22, 0
      %p61 = por %p59, %p60
      %p62 = scmp.ne.s32.totalorder %s48, %s49
      %p63 = scmp.eq.s32.totalorder %s23, 1
      %p64 = por %p62, %p63
      %p66 = scmp.ne.s32.totalorder %s49, %s65
      %p67 = scmp.eq.s32.totalorder %s23, 0
      %p68 = por %p66, %p67
      %s69 = sadd.s32 %s24, %s25
      %p70 = scmp.lt.s32.totalorder %s69, 0
      %s71 = scalar_select %p70, %s69, 0
      %s72 = sadd.s32 %s36, %s32
      %p73 = scmp.lt.s32.totalorder %s72, 0
      %s74 = scalar_select %p73, %s72, 0
      %s75 = ssub.s32 %s71, %s74
      %p76 = scmp.eq.s32.totalorder %s75, 0
      %s78 = sadd.s32 %s77, 1
      %s79 = scalar_select %p76, %s77, %s78
      %p82 = pneg %p76
      %p83 = scmp.eq.s32.totalorder %s17, 1
      %p84 = por %p82, %p83
      %p85 = scmp.ne.s32.totalorder %s77, %s80
      %p86 = scmp.eq.s32.totalorder %s17, 0
      %p87 = por %p85, %p86
      %p88 = scmp.ne.s32.totalorder %s77, %s80
      %p89 = scmp.eq.s32.totalorder %s22, 1
      %p90 = por %p88, %p89
      %p91 = scmp.ne.s32.totalorder %s80, %s81
      %p92 = scmp.eq.s32.totalorder %s22, 0
      %p93 = por %p91, %p92
      %p94 = scmp.ne.s32.totalorder %s80, %s81
      %p95 = scmp.eq.s32.totalorder %s23, 1
      %p96 = por %p94, %p95
      %p98 = scmp.ne.s32.totalorder %s81, %s97
      %p99 = scmp.eq.s32.totalorder %s23, 0
      %p100 = por %p98, %p99
      %s101 = ssub.s32 %s24, %s36
      %p102 = scmp.eq.s32.totalorder %s101, 0
      %s104 = sadd.s32 %s103, 1
      %s105 = scalar_select %p102, %s103, %s104
      %p108 = pneg %p102
      %p109 = scmp.eq.s32.totalorder %s17, 1
      %p110 = por %p108, %p109
      %p111 = scmp.ne.s32.totalorder %s103, %s106
      %p112 = scmp.eq.s32.totalorder %s17, 0
      %p113 = por %p111, %p112
      %p114 = scmp.ne.s32.totalorder %s103, %s106
      %p115 = scmp.eq.s32.totalorder %s22, 1
      %p116 = por %p114, %p115
      %p117 = scmp.ne.s32.totalorder %s106, %s107
      %p118 = scmp.eq.s32.totalorder %s22, 0
      %p119 = por %p117, %p118
      %p120 = scmp.ne.s32.totalorder %s106, %s107
      %p121 = scmp.eq.s32.totalorder %s23, 1
      %p122 = por %p120, %p121
      %p124 = scmp.ne.s32.totalorder %s107, %s123
      %p125 = scmp.eq.s32.totalorder %s23, 0
      %p126 = por %p124, %p125
      %p127 = scmp.le.s32.totalorder 1, %s17
      %p128 = scmp.lt.s32.totalorder %s17, 3
      %p129 = pnand %p127, %p128
      %p130 = pneg %p129
      // Predicated region
      $region9: #{tpu_custom_call.1} parent=5 // pred_check
        _
      $region10: #{tpu_custom_call.1} parent=5 // pred_check_branch
        %132 = sbr.rel (%p129) target = $region12
      $region11: #{tpu_custom_call.1} parent=5 // pred_region
        %s133 = ssub.s32 %s17, 1
      $region12: #{tpu_custom_call.1} parent=5 // pred_fallthru
        _
      %p134 = scmp.lt.s32.totalorder %s17, 2
      // Predicated region
      $region13: #{tpu_custom_call.1} parent=5 // pred_check
        %p135 = pneg %p134
      $region14: #{tpu_custom_call.1} parent=5 // pred_check_branch
        %137 = sbr.rel (%p135) target = $region16
      $region15: #{tpu_custom_call.1} parent=5 // pred_region
        // Predicated region
        $region17: #{tpu_custom_call.1} parent=15 // pred_check
          %p138 = pneg %p55
        $region18: #{tpu_custom_call.1} parent=15 // pred_check_branch
          %140 = sbr.rel (%p138) target = $region20
        $region19: #{tpu_custom_call.1} parent=15 // pred_region
          %s141 = sand.u32 %s45, 1
          %s142 = scalar_lea.sflag [#allocation3], %s141
          %s143 = sand.u32 %s45, 1
          %s144 = smul.addr %s143, 16
          %s145 = scalar_lea.vmem [#allocation2], %s144
          %s146 = sadd.s32 %s24, %s25
          %p147 = scmp.lt.s32.totalorder %s146, 0
          %s148 = scalar_select %p147, %s146, 0
          %s149 = smul.u32 2, %s148
          %s151 = ssub.s32 256, 256
          %152 = vsyncadd %s142, %s151
          %s153 = smul.addr %s149, 128
          %s154 = scalar_lea.hbm %s0, %s153
          %s155 = sshll.u32 %s145, 4
          %s156 = int_to_ptr.vmem [resolvable:$true] %s155
          %161 = dma.hbm_to_vmem [thread:$0]  %s154, 256, %s156, %s142, 128, 128, 8
        $region20: #{tpu_custom_call.1} parent=15 // pred_fallthru
          _
        // Predicated region
        $region21: #{tpu_custom_call.1} parent=15 // pred_check
          %p162 = pneg %p87
        $region22: #{tpu_custom_call.1} parent=15 // pred_check_branch
          %164 = sbr.rel (%p162) target = $region24
        $region23: #{tpu_custom_call.1} parent=15 // pred_region
          %s165 = sand.u32 %s77, 1
          %s166 = scalar_lea.sflag [#allocation6], %s165
          %s167 = sand.u32 %s77, 1
          %s168 = smul.addr %s167, 16
          %s169 = scalar_lea.vmem [#allocation5], %s168
          %s170 = sadd.s32 %s24, %s25
          %p171 = scmp.lt.s32.totalorder %s170, 0
          %s172 = scalar_select %p171, %s170, 0
          %s173 = smul.u32 2, %s172
          %s175 = ssub.s32 256, 256
          %176 = vsyncadd %s166, %s175
          %s177 = smul.addr %s173, 128
          %s178 = scalar_lea.hbm %s1, %s177
          %s179 = sshll.u32 %s169, 4
          %s180 = int_to_ptr.vmem [resolvable:$true] %s179
          %185 = dma.hbm_to_vmem [thread:$0]  %s178, 256, %s180, %s166, 128, 128, 8
        $region24: #{tpu_custom_call.1} parent=15 // pred_fallthru
          _
      $region16: #{tpu_custom_call.1} parent=5 // pred_fallthru
        _
      %p186 = scmp.le.s32.totalorder 1, %s17
      %p187 = scmp.lt.s32.totalorder %s17, 3
      %p188 = pnand %p186, %p187
      %p189 = pneg %p188
      // Predicated region
      $region25: #{tpu_custom_call.1} parent=5 // pred_check
        _
      $region26: #{tpu_custom_call.1} parent=5 // pred_check_branch
        %191 = sbr.rel (%p188) target = $region28
      $region27: #{tpu_custom_call.1} parent=5 // pred_region
        %s192 = ssub.s32 %s17, 1
        %s193 = sand.u32 %s48, 1
        %s194 = scalar_lea.sflag [#allocation3], %s193
        %s195 = sand.u32 %s48, 1
        %s196 = smul.addr %s195, 16
        %s197 = scalar_lea.vmem [#allocation2], %s196
        // Predicated region
        $region29: #{tpu_custom_call.1} parent=27 // pred_check
          %p198 = pneg %p61
        $region30: #{tpu_custom_call.1} parent=27 // pred_check_branch
          %200 = sbr.rel (%p198) target = $region32
        $region31: #{tpu_custom_call.1} parent=27 // pred_region
          %201 = dma.done %s194, 256
        $region32: #{tpu_custom_call.1} parent=27 // pred_fallthru
          _
        %s202 = sand.u32 %s80, 1
        %s203 = scalar_lea.sflag [#allocation6], %s202
        %s204 = sand.u32 %s80, 1
        %s205 = smul.addr %s204, 16
        %s206 = scalar_lea.vmem [#allocation5], %s205
        // Predicated region
        $region33: #{tpu_custom_call.1} parent=27 // pred_check
          %p207 = pneg %p93
        $region34: #{tpu_custom_call.1} parent=27 // pred_check_branch
          %209 = sbr.rel (%p207) target = $region36
        $region35: #{tpu_custom_call.1} parent=27 // pred_region
          %210 = dma.done %s203, 256
        $region36: #{tpu_custom_call.1} parent=27 // pred_fallthru
          _
        %s211 = sand.u32 %s48, 1
        %s212 = scalar_lea.sflag [#allocation3], %s211
        %s213 = sand.u32 %s48, 1
        %s214 = smul.addr %s213, 16
        %s215 = scalar_lea.vmem [#allocation2], %s214
        %p216 = pneg %p61
        %p217 = pneg %p58
        %s218 = sand.u32 %s80, 1
        %s219 = scalar_lea.sflag [#allocation6], %s218
        %s220 = sand.u32 %s80, 1
        %s221 = smul.addr %s220, 16
        %s222 = scalar_lea.vmem [#allocation5], %s221
        %p223 = pneg %p93
        %p224 = pneg %p90
        %p225 = pneg %p119
        %p226 = pneg %p116
        %s227 = sand.u32 %s106, 1
        %s228 = scalar_lea.sflag [#allocation4], %s227
        %s229 = sand.u32 %s106, 1
        %s230 = smul.addr %s229, 8
        %s231 = scalar_lea.vmem [#allocation7], %s230
        %s232 = sadd.s32 %s26, %s27
        %p233 = scmp.lt.s32.totalorder %s232, 0
        %s234 = scalar_select %p233, %s232, 0
        %s235 = smul.u32 2, %s234
        %s236 = sadd.s32 %s26, %s27
        %p237 = scmp.lt.s32.totalorder %s236, 0
        %s238 = scalar_select %p237, %s236, 0
        %s239 = smul.u32 2, %s238
        %p240 = scmp.eq.s32.totalorder %s27, 0
        // Predicated region
        $region37: #{tpu_custom_call.1} parent=27 // pred_check
          %p241 = pneg %p240
        $region38: #{tpu_custom_call.1} parent=27 // pred_check_branch
          %243 = sbr.rel (%p241) target = $region40
        $region39: #{tpu_custom_call.1} parent=27 // pred_region
          %244 = vst [vmem:[%s231] sm:$0xff] 0.0
        $region40: #{tpu_custom_call.1} parent=27 // pred_fallthru
          _
        %v245 = vld [vmem:[%s197] sm:$0xff]
        %v246 = vld [vmem:[%s197 + $0x8] sm:$0xff]
        %v247 = vld [vmem:[%s206] sm:$0xff]
        %v248 = vld [vmem:[%s206 + $0x8] sm:$0xff]
        %v249 = vlog2.pop %v245
        %v250 = vmul.f32 %v249, 0.6931472
        %v251 = vlog2.pop %v246
        %v252 = vmul.f32 %v251, 0.6931472
        %v253 = vmax.f32 %v250, -100.0
        %v254 = vmax.f32 %v252, -100.0
        %v255 = vsub.f32 0.0, %v245
        %v256 = vsub.f32 0.0, %v246
        %v257 = vadd.f32 %v255, 1.0
        %v258 = vlog2.pop %v257
        %v259 = vmul.f32 %v258, 0.6931472
        %v260 = vmul.f32 -0.5, %v255
        %v261 = vadd.f32 %v260, 1.0
        %v262 = vmul.f32 %v261, %v255
        %v263 = vand.u32 2147483647, %v255
        %vm264 = vcmp.lt.f32.partialorder %v263, 0.0004427343
        %v265 = vsel %vm264, %v262, %v259
        %v266 = vadd.f32 %v256, 1.0
        %v267 = vlog2.pop %v266
        %v268 = vmul.f32 %v267, 0.6931472
        %v269 = vmul.f32 -0.5, %v256
        %v270 = vadd.f32 %v269, 1.0
        %v271 = vmul.f32 %v270, %v256
        %v272 = vand.u32 2147483647, %v256
        %vm273 = vcmp.lt.f32.partialorder %v272, 0.0004427343
        %v274 = vsel %vm273, %v271, %v268
        %v275 = vmax.f32 %v265, -100.0
        %v276 = vmax.f32 %v274, -100.0
        %v277 = vmul.f32 %v247, %v253
        %v278 = vmul.f32 %v248, %v254
        %v279 = vsub.f32 1.0, %v247
        %v280 = vsub.f32 1.0, %v248
        %v281 = vmul.f32 %v279, %v275
        %v282 = vmul.f32 %v280, %v276
        %v283 = vadd.f32 %v277, %v281
        %v284 = vadd.f32 %v278, %v282
        %v285 = vsub.f32 0.0, %v283
        %v286 = vsub.f32 0.0, %v284
        %s287 = sadd.s32 %s26, %s27
        %s288 = smul.u32 %s287, 16
        %s289 = sadd.s32 %s288, 16
        %p290 = scmp.le.s32.totalorder %s289, 16
        // Predicated region
        $region41: #{tpu_custom_call.1} parent=27 // pred_check
          %p291 = pneg %p290
        $region42: #{tpu_custom_call.1} parent=27 // pred_check_branch
          %293 = sbr.rel (%p291) target = $region44
        $region43: #{tpu_custom_call.1} parent=27 // pred_region
          %v294 = vld [vmem:[%s231] sm:$0xff]
          %v295 = vadd.f32 %v285, %v286
          %v296 = vadd.f32 %v294, %v295
          %297 = vst [vmem:[%s231] sm:$0xff] %v296
        $region44: #{tpu_custom_call.1} parent=27 // pred_fallthru
          _
        %p298 = scmp.gt.s32.totalorder %s289, 16
        // Predicated region
        $region45: #{tpu_custom_call.1} parent=27 // pred_check
          %p299 = pneg %p298
        $region46: #{tpu_custom_call.1} parent=27 // pred_check_branch
          %301 = sbr.rel (%p299) target = $region48
        $region47: #{tpu_custom_call.1} parent=27 // pred_region
          %v302 = vlaneseq
          %v303 = vshrl.u32 %v302, 7
          %v304 = vadd.s32 %v303, 8
          %v305 = vstv %s288
          %v306 = vadd.s32 %v305, %v303
          %v307 = vadd.s32 %v305, %v304
          %vm308 = vcmp.lt.s32.totalorder %v306, 16
          %vm309 = vcmp.lt.s32.totalorder %v307, 16
          %v310 = vsel %vm308, %v285, 0.0
          %v311 = vsel %vm309, %v286, 0.0
          %v312 = vld [vmem:[%s231] sm:$0xff]
          %v313 = vadd.f32 %v310, %v311
          %v314 = vadd.f32 %v312, %v313
          %315 = vst [vmem:[%s231] sm:$0xff] %v314
        $region48: #{tpu_custom_call.1} parent=27 // pred_fallthru
          _
        %s316 = sand.u32 %s106, 1
        %s317 = scalar_lea.sflag [#allocation4], %s316
        %s318 = sand.u32 %s106, 1
        %s319 = smul.addr %s318, 8
        %s320 = scalar_lea.vmem [#allocation7], %s319
        // Predicated region
        $region49: #{tpu_custom_call.1} parent=27 // pred_check
          %p321 = pneg %p116
        $region50: #{tpu_custom_call.1} parent=27 // pred_check_branch
          %323 = sbr.rel (%p321) target = $region52
        $region51: #{tpu_custom_call.1} parent=27 // pred_region
          %s325 = ssub.s32 128, 128
          %326 = vsyncadd %s317, %s325
          %s327 = smul.addr %s26, 128
          %s328 = scalar_lea.hbm %s2, %s327
          %s330 = sshll.u32 %s320, 4
          %s331 = int_to_ptr.vmem [resolvable:$true] %s330
          %333 = dma.vmem_to_hbm [thread:$0]  %s331, 128, %s328, %s317
        $region52: #{tpu_custom_call.1} parent=27 // pred_fallthru
          _
      $region28: #{tpu_custom_call.1} parent=5 // pred_fallthru
        _
      %p334 = scmp.le.s32.totalorder 2, %s17
      // Predicated region
      $region53: #{tpu_custom_call.1} parent=5 // pred_check
        %p335 = pneg %p334
      $region54: #{tpu_custom_call.1} parent=5 // pred_check_branch
        %337 = sbr.rel (%p335) target = $region56
      $region55: #{tpu_custom_call.1} parent=5 // pred_region
        %s338 = ssub.s32 %s17, 2
        // Predicated region
        $region57: #{tpu_custom_call.1} parent=55 // pred_check
          %p339 = pneg %p122
        $region58: #{tpu_custom_call.1} parent=55 // pred_check_branch
          %341 = sbr.rel (%p339) target = $region60
        $region59: #{tpu_custom_call.1} parent=55 // pred_region
          %s342 = sand.u32 %s107, 1
          %s343 = scalar_lea.sflag [#allocation4], %s342
          %s344 = sand.u32 %s107, 1
          %s345 = smul.addr %s344, 8
          %s346 = scalar_lea.vmem [#allocation7], %s345
          %347 = dma.done %s343, 128
        $region60: #{tpu_custom_call.1} parent=55 // pred_fallthru
          _
      $region56: #{tpu_custom_call.1} parent=5 // pred_fallthru
        _
    $region6: #{tpu_custom_call.1} parent=1 // loop_footer
      %s21 = sadd.s32 1, %s17
    $region7: #{tpu_custom_call.1} parent=1 // loop_footer_branch
      %16 = sbr.rel target = $region3
    $region8: #{tpu_custom_call.1} parent=1 // loop_exit
      _
    %348 = vsyncpa [#allocation3], 1
    %s349 = scalar_lea.sflag [#allocation3], 1
    %350 = vsyncpa %s349, 1
    %351 = vsyncpa [#allocation6], 1
    %s352 = scalar_lea.sflag [#allocation6], 1
    %353 = vsyncpa %s352, 1
    %354 = vsyncpa [#allocation4], 1
    %s355 = scalar_lea.sflag [#allocation4], 1
    %356 = vsyncpa %s355, 1

</llo_original>
